<compile_context>
chip_gen: v5e
topology: v5e:2x2
jax: 0.10.0
libtpu: 0.0.40
codegen_flags: <defaults>
</compile_context>

<pallas_src>
import functools

import jax
import jax.numpy as jnp
from jax.experimental import pallas as pl
from jax.experimental.pallas import tpu as pltpu

_MIB = 1024 * 1024


def _msrp_loss_kernel(out_ref, lab_ref, loss_ref, correct_ref, *,
                      B, TB, C, slice_labels):
    """One batch tile: (TB, C) scores + (TB or Bp, 1) labels -> per-tile
    partial (loss_sum, correct_count). Rows past B (ragged last tile) masked."""
    i = pl.program_id(0)

    if slice_labels:
        # Labels are VMEM-resident for the whole (padded) batch; slice our rows.
        lab = lab_ref[pl.ds(pl.multiple_of(i * TB, 8), TB), :]
    else:
        lab = lab_ref[...]                                   # (TB, 1) int32

    out = out_ref[...].astype(jnp.float32)                   # cast after DMA

    col = jax.lax.broadcasted_iota(jnp.int32, (TB, C), 1)    # lane index
    is_label = col == lab                                    # one-hot over lanes

    # Validity of each row as a (TB, 1) column (no full-tile row iota).
    valid = (jax.lax.broadcasted_iota(jnp.int32, (TB, 1), 0) + i * TB) < B

    # ground_score = out[r, labels[r]] (exact: one nonzero per row).
    ground = jnp.sum(jnp.where(is_label, out, 0.0), axis=1, keepdims=True)

    # sum_{j != label} max(out_j - ground + 1, 0):
    # label column contributes exactly 1.0, so subtract it after the row-sum.
    hinge = jnp.maximum(out - ground + 1.0, 0.0)
    row_sum = jnp.sum(hinge, axis=1, keepdims=True)          # (TB, 1) XLU reduce
    row_loss = jnp.where(valid, row_sum - 1.0, 0.0)          # where kills padded NaN
    loss_ref[...] = jnp.sum(row_loss).reshape(1, 1, 1)

    # correct <=> first-index argmax == label:
    # no j with out_j > ground, and no j < label with out_j == ground.
    bad = jnp.logical_or(out > ground,
                         jnp.logical_and(out == ground, col < lab))
    n_bad = jnp.sum(bad.astype(jnp.float32), axis=1, keepdims=True)
    correct_row = jnp.logical_and(n_bad == 0.0, valid)
    correct_ref[...] = jnp.sum(correct_row.astype(jnp.int32)).reshape(1, 1, 1)


def msrp_loss(outputs, labels, *, target_tile_bytes=2 * _MIB):
    """outputs: (B, C) float (any dtype); labels: (B,) int.
    Returns (loss scalar f32, correct_count i32) matching MSRPLoss.forward."""
    B, C = outputs.shape
    dtype_bytes = jnp.dtype(outputs.dtype).itemsize

    # --- Byte-based tile sizing (target ~2 MiB of native input per tile). ---
    rows_budget = max(8, (target_tile_bytes // max(1, C * dtype_bytes)) // 8 * 8)
    if B <= rows_budget:
        TB, num_tiles = B, 1
    else:
        tiles_min = -(-B // rows_budget)          # ceil(B / rows_budget)
        k = -(-tiles_min // 2)                    # use 2k tiles -> megacore balance
        TB = ((-(-B // (2 * k)) + 7) // 8) * 8    # round_up_8(ceil(B / 2k)) <= budget
        num_tiles = -(-B // TB)

    Bp = num_tiles * TB
    labels2d = labels.astype(jnp.int32).reshape(B, 1)
    if Bp > B:
        labels2d = jnp.pad(labels2d, ((0, Bp - B), (0, 0)))   # in-bounds slicing

    # Labels: one resident VMEM copy (single DMA, revisited block) when the
    # lane-padded column footprint is small; otherwise per-tile blocks.
    labels_resident = Bp * 512 <= 2 * _MIB
    if labels_resident:
        lab_spec = pl.BlockSpec((Bp, 1), lambda i: (0, 0))
    else:
        lab_spec = pl.BlockSpec((TB, 1), lambda i: (i, 0))

    # --- VMEM budget from the real footprint, generation-aware cap. ---
    in_tile_bytes = TB * C * dtype_bytes
    f32_tile_bytes = TB * C * 4
    lab_vmem = (Bp if labels_resident else 2 * TB) * 512
    vmem_needed = 2 * in_tile_bytes + 4 * f32_tile_bytes + lab_vmem + 256 * 1024
    try:
        vmem_cap = pltpu.get_tpu_info().vmem_capacity_bytes
    except Exception:
        vmem_cap = 128 * _MIB
    budget_cap = min(48 * _MIB, vmem_cap // 2)    # -> 32 MiB cap on v7x (64 MiB part)
    vmem_limit = int(min(budget_cap, max(16 * _MIB, vmem_needed)))

    cost = pl.CostEstimate(
        flops=10 * B * C,
        transcendentals=0,
        bytes_accessed=B * C * dtype_bytes + Bp * 4 + num_tiles * 8,
    )

    kernel = functools.partial(
        _msrp_loss_kernel, B=B, TB=TB, C=C,
        slice_labels=(labels_resident and num_tiles > 1))

    loss_p, correct_p = pl.pallas_call(
        kernel,
        out_shape=(
            jax.ShapeDtypeStruct((num_tiles, 1, 1), jnp.float32),
            jax.ShapeDtypeStruct((num_tiles, 1, 1), jnp.int32),
        ),
        grid=(num_tiles,),
        in_specs=[
            pl.BlockSpec((TB, C), lambda i: (i, 0)),
            lab_spec,
        ],
        out_specs=(
            pl.BlockSpec((1, 1, 1), lambda i: (i, 0, 0)),
            pl.BlockSpec((1, 1, 1), lambda i: (i, 0, 0)),
        ),
        compiler_params=pltpu.CompilerParams(
            dimension_semantics=("parallel",),    # shards tiles across TCs (v7x)
            vmem_limit_bytes=vmem_limit,
        ),
        cost_estimate=cost,
    )(outputs, labels2d)

    loss = jnp.sum(loss_p) / jnp.float32(B)       # divide by full B exactly once
    correct = jnp.sum(correct_p)
    return loss, correct


def msrp_loss_ref(outputs, labels):
    """Pure-JAX reference matching the PyTorch loop semantics."""
    B, C = outputs.shape
    out = outputs.astype(jnp.float32)
    ground = jnp.take_along_axis(out, labels.reshape(B, 1), axis=1)
    hinge = jnp.maximum(out - ground + 1.0, 0.0)
    mask = jax.nn.one_hot(labels, C, dtype=jnp.float32)
    hinge = hinge * (1.0 - mask)
    loss = jnp.sum(hinge) / B
    correct = jnp.sum((jnp.argmax(out, axis=1) == labels).astype(jnp.int32))
    return loss, correct


if __name__ == "__main__":
    key = jax.random.PRNGKey(0)
    k1, k2 = jax.random.split(key)

    # Small single-tile f32 case consistent with the module (batch of class scores).
    B, C = 8, 16
    outputs = jax.random.normal(k1, (B, C), dtype=jnp.float32)
    labels = jax.random.randint(k2, (B,), 0, C, dtype=jnp.int32)
    loss, correct = msrp_loss(outputs, labels)
    jax.block_until_ready((loss, correct))
    loss_r, correct_r = msrp_loss_ref(outputs, labels)
    assert jnp.allclose(loss, loss_r, rtol=1e-4, atol=1e-4), (loss, loss_r)
    assert int(correct) == int(correct_r), (correct, correct_r)

    # bf16 input, forced multi-tile (4 tiles), ragged last tile, resident labels.
    k3, k4 = jax.random.split(k2)
    B2, C2 = 1050, 64
    outputs2 = jax.random.normal(k3, (B2, C2), dtype=jnp.float32).astype(jnp.bfloat16)
    labels2 = jax.random.randint(k4, (B2,), 0, C2, dtype=jnp.int32)
    loss2, correct2 = msrp_loss(outputs2, labels2, target_tile_bytes=64 * 1024)
    jax.block_until_ready((loss2, correct2))
    loss2_r, correct2_r = msrp_loss_ref(outputs2, labels2)
    assert jnp.allclose(loss2, loss2_r, rtol=1e-3, atol=1e-3), (loss2, loss2_r)
    assert int(correct2) == int(correct2_r), (correct2, correct2_r)

    # f32, larger batch: exercises the per-tile (non-resident) label path, 10 tiles.
    k5, k6 = jax.random.split(k4)
    B3, C3 = 4160, 32
    outputs3 = jax.random.normal(k5, (B3, C3), dtype=jnp.float32)
    labels3 = jax.random.randint(k6, (B3,), 0, C3, dtype=jnp.int32)
    loss3, correct3 = msrp_loss(outputs3, labels3, target_tile_bytes=64 * 1024)
    jax.block_until_ready((loss3, correct3))
    loss3_r, correct3_r = msrp_loss_ref(outputs3, labels3)
    assert jnp.allclose(loss3, loss3_r, rtol=1e-4, atol=1e-4), (loss3, loss3_r)
    assert int(correct3) == int(correct3_r), (correct3, correct3_r)

    # TODO(synk): the .is_cuda device check and requires_grad/grad_fn bookkeeping
    # from the PyTorch module have no JAX/Pallas equivalent (autodiff is external).
    print("KERNEL_OK")
</pallas_src>

<mosaic_0001>
module attributes {stable_mosaic.version = 11 : i64} {
  func.func @_msrp_loss_kernel(%arg0: i32, %arg1: memref<8x16xf32, #tpu.memory_space<vmem>>, %arg2: memref<8x1xi32, #tpu.memory_space<vmem>>, %arg3: memref<1x1x1xf32, #tpu.memory_space<vmem>>, %arg4: memref<1x1x1xi32, #tpu.memory_space<vmem>>) attributes {dimension_semantics = [#tpu.dimension_semantics<parallel>], iteration_bounds = array<i64: 1>, scalar_prefetch = 0 : i64, scratch_operands = 0 : i64, tpu.core_type = #tpu.core_type<tc>, window_params = [{transform_indices = @transform_0, window_bounds = array<i64: 8, 16>}, {pipeline_mode = #tpu.pipeline_mode<synchronous>, transform_indices = @transform_1, window_bounds = array<i64: 8, 1>}, {transform_indices = @transform_2, window_bounds = array<i64: 1, 1, 1>}, {transform_indices = @transform_3, window_bounds = array<i64: 1, 1, 1>}]} {
    %c0 = arith.constant 0 : index
    %c0_0 = arith.constant 0 : index
    %0 = vector.load %arg2[%c0, %c0_0] : memref<8x1xi32, #tpu.memory_space<vmem>>, vector<8x1xi32>
    %c0_1 = arith.constant 0 : index
    %c0_2 = arith.constant 0 : index
    %1 = vector.load %arg1[%c0_1, %c0_2] : memref<8x16xf32, #tpu.memory_space<vmem>>, vector<8x16xf32>
    %2 = tpu.iota {dimensions = array<i32: 1>} : vector<8x16xi32>
    %3 = vector.broadcast %0 : vector<8x1xi32> to vector<8x16xi32>
    %4 = arith.cmpi eq, %2, %3 : vector<8x16xi32>
    %5 = tpu.iota {dimensions = array<i32: 0>} : vector<8x1xi32>
    %c8_i32 = arith.constant 8 : i32
    %6 = arith.muli %arg0, %c8_i32 : i32
    %7 = vector.broadcast %6 : i32 to vector<8x1xi32>
    %8 = arith.addi %5, %7 : vector<8x1xi32>
    %c8_i32_3 = arith.constant 8 : i32
    %9 = vector.broadcast %c8_i32_3 : i32 to vector<8x1xi32>
    %10 = arith.cmpi slt, %8, %9 : vector<8x1xi32>
    %cst = arith.constant 0.000000e+00 : f32
    %11 = vector.broadcast %cst : f32 to vector<8x16xf32>
    %12 = arith.select %4, %1, %11 : vector<8x16xi1>, vector<8x16xf32>
    %cst_4 = arith.constant dense<0.000000e+00> : vector<8xf32>
    %13 = vector.multi_reduction <add>, %12, %cst_4 [1] : vector<8x16xf32> to vector<8xf32>
    %14 = vector.shape_cast %13 : vector<8xf32> to vector<8x1xf32>
    %15 = vector.broadcast %14 : vector<8x1xf32> to vector<8x16xf32>
    %16 = arith.subf %1, %15 : vector<8x16xf32>
    %cst_5 = arith.constant 1.000000e+00 : f32
    %17 = vector.broadcast %cst_5 : f32 to vector<8x16xf32>
    %18 = arith.addf %16, %17 : vector<8x16xf32>
    %cst_6 = arith.constant 0.000000e+00 : f32
    %19 = vector.broadcast %cst_6 : f32 to vector<8x16xf32>
    %20 = arith.maximumf %18, %19 : vector<8x16xf32>
    %cst_7 = arith.constant dense<0.000000e+00> : vector<8xf32>
    %21 = vector.multi_reduction <add>, %20, %cst_7 [1] : vector<8x16xf32> to vector<8xf32>
    %22 = vector.shape_cast %21 : vector<8xf32> to vector<8x1xf32>
    %cst_8 = arith.constant 1.000000e+00 : f32
    %23 = vector.broadcast %cst_8 : f32 to vector<8x1xf32>
    %24 = arith.subf %22, %23 : vector<8x1xf32>
    %cst_9 = arith.constant 0.000000e+00 : f32
    %25 = vector.broadcast %cst_9 : f32 to vector<8x1xf32>
    %26 = arith.select %10, %24, %25 : vector<8x1xi1>, vector<8x1xf32>
    %27 = vector.shape_cast %26 : vector<8x1xf32> to vector<1x8x1xf32>
    %cst_10 = arith.constant dense<0.000000e+00> : vector<1xf32>
    %28 = vector.multi_reduction <add>, %27, %cst_10 [1, 2] : vector<1x8x1xf32> to vector<1xf32>
    %29 = vector.shape_cast %28 : vector<1xf32> to vector<1x1x1xf32>
    %30 = vector.extract %29[0, 0, 0] : f32 from vector<1x1x1xf32>
    %31 = vector.broadcast %30 : f32 to vector<1x1x1xf32>
    %c0_11 = arith.constant 0 : index
    %c0_12 = arith.constant 0 : index
    %c0_13 = arith.constant 0 : index
    %32 = vector.load %arg3[%c0_11, %c0_12, %c0_13] : memref<1x1x1xf32, #tpu.memory_space<vmem>>, vector<1x1x1xf32>
    tpu.vector_store %arg3[%c0_11, %c0_12, %c0_13], %31 {strides = array<i32>} : memref<1x1x1xf32, #tpu.memory_space<vmem>>, vector<1x1x1xf32>,
    %33 = vector.broadcast %14 : vector<8x1xf32> to vector<8x16xf32>
    %34 = arith.cmpf ogt, %1, %33 : vector<8x16xf32>
    %35 = vector.broadcast %14 : vector<8x1xf32> to vector<8x16xf32>
    %36 = arith.cmpf oeq, %1, %35 : vector<8x16xf32>
    %37 = vector.broadcast %0 : vector<8x1xi32> to vector<8x16xi32>
    %38 = arith.cmpi slt, %2, %37 : vector<8x16xi32>
    %39 = arith.andi %36, %38 : vector<8x16xi1>
    %40 = arith.ori %34, %39 : vector<8x16xi1>
    %41 = arith.extui %40 : vector<8x16xi1> to vector<8x16xi32>
    %42 = arith.sitofp %41 : vector<8x16xi32> to vector<8x16xf32>
    %cst_14 = arith.constant dense<0.000000e+00> : vector<8xf32>
    %43 = vector.multi_reduction <add>, %42, %cst_14 [1] : vector<8x16xf32> to vector<8xf32>
    %44 = vector.shape_cast %43 : vector<8xf32> to vector<8x1xf32>
    %cst_15 = arith.constant 0.000000e+00 : f32
    %45 = vector.broadcast %cst_15 : f32 to vector<8x1xf32>
    %46 = arith.cmpf oeq, %44, %45 : vector<8x1xf32>
    %47 = arith.andi %46, %10 : vector<8x1xi1>
    %48 = arith.extui %47 : vector<8x1xi1> to vector<8x1xi32>
    %49 = vector.shape_cast %48 : vector<8x1xi32> to vector<1x8x1xi32>
    %cst_16 = arith.constant dense<0> : vector<1xi32>
    %50 = vector.multi_reduction <add>, %49, %cst_16 [1, 2] : vector<1x8x1xi32> to vector<1xi32>
    %51 = vector.shape_cast %50 : vector<1xi32> to vector<1x1x1xi32>
    %52 = vector.extract %51[0, 0, 0] : i32 from vector<1x1x1xi32>
    %53 = vector.broadcast %52 : i32 to vector<1x1x1xi32>
    %c0_17 = arith.constant 0 : index
    %c0_18 = arith.constant 0 : index
    %c0_19 = arith.constant 0 : index
    %54 = vector.load %arg4[%c0_17, %c0_18, %c0_19] : memref<1x1x1xi32, #tpu.memory_space<vmem>>, vector<1x1x1xi32>
    tpu.vector_store %arg4[%c0_17, %c0_18, %c0_19], %53 {strides = array<i32>} : memref<1x1x1xi32, #tpu.memory_space<vmem>>, vector<1x1x1xi32>,
    return
  }
  func.func @transform_0(%arg0: i32) -> (i32, i32) {
    %c0_i32 = arith.constant 0 : i32
    %c0_i32_0 = arith.constant 0 : i32
    return %arg0, %c0_i32 : i32, i32
  }
  func.func @transform_1(%arg0: i32) -> (i32, i32) {
    %c0_i32 = arith.constant 0 : i32
    %c0_i32_0 = arith.constant 0 : i32
    %c0_i32_1 = arith.constant 0 : i32
    return %c0_i32, %c0_i32_0 : i32, i32
  }
  func.func @transform_2(%arg0: i32) -> (i32, i32, i32) {
    %c0_i32 = arith.constant 0 : i32
    %c0_i32_0 = arith.constant 0 : i32
    %c0_i32_1 = arith.constant 0 : i32
    return %arg0, %c0_i32, %c0_i32_0 : i32, i32, i32
  }
  func.func @transform_3(%arg0: i32) -> (i32, i32, i32) {
    %c0_i32 = arith.constant 0 : i32
    %c0_i32_0 = arith.constant 0 : i32
    %c0_i32_1 = arith.constant 0 : i32
    return %arg0, %c0_i32, %c0_i32_0 : i32, i32, i32
  }
}

</mosaic_0001>

<llo_original>
// kernel: tpu_custom_call.1
$region0: #{tpu_custom_call.1}
  #allocation0 [shape = 'u32[]', space=smem, size = 0x4, offset = 0x4, fixed_abs, tag = 'smem constant byte address 0x4 - core index']
  #allocation1 [shape = 'u32[72,128]{1,0:T(1,128)}', space=vmem, size = 0x9000, scoped, tag = 'internal scratch']
  %s0 = inlined_call_operand.vmem [shape: f32[8,16], index: 0, kind: input, shape index: {}]
  %s1 = inlined_call_operand.vmem [shape: s32[8,1], index: 1, kind: input, shape index: {}]
  %s2 = inlined_call_operand.hbm [shape: f32[1,1,1], index: 2, kind: output, shape index: {0}]
  %s3 = inlined_call_operand.hbm [shape: s32[1,1,1], index: 3, kind: output, shape index: {1}]
  %4 = xla_tuple %s2, %s3
  %s5 = sld [smem:[#allocation0]]
  $region26: #{tpu_custom_call.1} parent=0
    _
  %s7 = ssub.s32 1, %s5
  %s8 = scalar_select 0, %s7, %s5
  $region1: #{tpu_custom_call.1} parent=0
    #allocation2 [shape = 'u8[512]{0}', space=vmem, size = 0x400, scoped, tag = 'output window, operand 0, single buffered']
    #allocation3 [shape = 's32[1]{0}', space=sflag, size = 0x4, scoped, tag = 'scoped memory for tpu_custom_call.1']
    #allocation4 [shape = 'u8[512]{0}', space=vmem, size = 0x400, scoped, tag = 'output window, operand 1, single buffered']
    #allocation5 [shape = 's32[1]{0}', space=sflag, size = 0x4, scoped, tag = 'scoped memory for tpu_custom_call.1']
    %9 = vsyncpa [#allocation3], 0
    %10 = vsyncpa [#allocation5], 0
    // Predicated region
    $region2: #{tpu_custom_call.1} parent=1 // pred_check
      _
    $region3: #{tpu_custom_call.1} parent=1 // pred_check_branch
      %12 = sbr.rel (0) target = $region5
    $region4: #{tpu_custom_call.1} parent=1 // pred_region
      _
    $region5: #{tpu_custom_call.1} parent=1 // pred_fallthru
      _
    // Predicated region
    $region6: #{tpu_custom_call.1} parent=1 // pred_check
      _
    $region7: #{tpu_custom_call.1} parent=1 // pred_check_branch
      %14 = sbr.rel (0) target = $region9
    $region8: #{tpu_custom_call.1} parent=1 // pred_region
      _
    $region9: #{tpu_custom_call.1} parent=1 // pred_fallthru
      _
    %v15 = vld [vmem:[%s1] sm:$0xff]
    %v16 = vld [vmem:[%s0] sm:$0xff]
    %v17 = vlaneseq
    %v18 = vand.u32 %v17, 127
    %19 = vset.pattern.permute.xlu0 0
    %20 = vperm.xlu0 %19, %v15
    %v21 = vpop.permute.xlu0 %20
    %vm22 = vcmp.eq.s32.totalorder %v18, %v21
    %v23 = vlaneseq
    %v24 = vshrl.u32 %v23, 7
    %s25 = smul.u32 0, 8
    %v26 = vstv %s25
    %v27 = vadd.s32 %v24, %v26
    %vm28 = vcmp.lt.s32.totalorder %v27, 8
    %v29 = vsel %vm22, %v16, 0.0
    %vm30 = vcmask 130048
    %v31 = vsel %vm30, %v29, 0.0
    %32 = vadd.xlane.f32.xlu0 %v31
    %v33 = vpop.xlane.xlu0 %32
    %v34 = vsub.f32 %v16, %v33
    %v35 = vadd.f32 %v34, 1.0
    %v36 = vmax.f32 %v35, 0.0
    %v37 = vsel %vm30, %v36, 0.0
    %38 = vadd.xlane.f32.xlu0 %v37
    %v39 = vpop.xlane.xlu0 %38
    %v40 = vsub.f32 %v39, 1.0
    %v41 = vsel %vm28, %v40, 0.0
    %vm42 = vcmask 7168
    %v43 = vsel %vm42, %v41, 0.0
    %44 = vadd.xlane.f32.xlu0 %v43
    %v45 = vpop.xlane.xlu0 %44
    %v46 = vrot.slane %v45, 4
    %v47 = vadd.f32 %v45, %v46
    %v48 = vrot.slane %v47, 2
    %v49 = vadd.f32 %v47, %v48
    %v50 = vrot.slane %v49, 1
    %v51 = vadd.f32 %v49, %v50
    %s52 = vtos %v51
    %v53 = vstv %s52
    %vm54 = vcmask 0
    %55 = vst.msk [vmem:[#allocation2] sm:$0x1] %vm54, %v53
    %vm56 = vcmp.gt.f32.partialorder %v16, %v33
    %vm57 = vcmp.eq.f32.partialorder %v16, %v33
    %vm58 = vcmp.lt.s32.totalorder %v18, %v21
    %vm59 = vmand %vm57, %vm58
    %vm60 = vmor %vm56, %vm59
    %v61 = vsel %vm60, 1, 0
    %v62 = vcvt.s32.f32 %v61
    %v63 = vsel %vm30, %v62, 0.0
    %64 = vadd.xlane.f32.xlu0 %v63
    %v65 = vpop.xlane.xlu0 %64
    %vm66 = vcmp.eq.f32.partialorder %v65, 0.0
    %vm67 = vmand %vm66, %vm28
    %v68 = vsel %vm67, 1, 0
    %v69 = vrot.slane %v68, 4
    %v70 = vadd.s32 %v68, %v69
    %v71 = vrot.slane %v70, 2
    %v72 = vadd.s32 %v70, %v71
    %v73 = vrot.slane %v72, 1
    %v74 = vadd.s32 %v72, %v73
    %s75 = vtos %v74
    %v76 = vstv %s75
    %77 = vst.msk [vmem:[#allocation4] sm:$0x1] %vm54, %v76
    // Predicated region
    $region10: #{tpu_custom_call.1} parent=1 // pred_check
      _
    $region11: #{tpu_custom_call.1} parent=1 // pred_check_branch
      %79 = sbr.rel (0) target = $region13
    $region12: #{tpu_custom_call.1} parent=1 // pred_region
      %81 = vsyncadd [#allocation3], 0
      %s83 = sshll.u32 [#allocation2], 4
      %s84 = int_to_ptr.vmem [resolvable:$true] %s83
      %s85 = sshll.u32 %s2, 4
      %s86 = int_to_ptr.hbm [resolvable:$true] %s85
      %88 = dma.vmem_to_hbm [thread:$0]  %s84, 16, %s86, [#allocation3]
    $region13: #{tpu_custom_call.1} parent=1 // pred_fallthru
      _
    // Predicated region
    $region14: #{tpu_custom_call.1} parent=1 // pred_check
      _
    $region15: #{tpu_custom_call.1} parent=1 // pred_check_branch
      %90 = sbr.rel (0) target = $region17
    $region16: #{tpu_custom_call.1} parent=1 // pred_region
      %92 = vsyncadd [#allocation5], 0
      %s94 = sshll.u32 [#allocation4], 4
      %s95 = int_to_ptr.vmem [resolvable:$true] %s94
      %s96 = sshll.u32 %s3, 4
      %s97 = int_to_ptr.hbm [resolvable:$true] %s96
      %99 = dma.vmem_to_hbm [thread:$0]  %s95, 16, %s97, [#allocation5]
    $region17: #{tpu_custom_call.1} parent=1 // pred_fallthru
      _
    // Predicated region
    $region18: #{tpu_custom_call.1} parent=1 // pred_check
      _
    $region19: #{tpu_custom_call.1} parent=1 // pred_check_branch
      %101 = sbr.rel (0) target = $region21
    $region20: #{tpu_custom_call.1} parent=1 // pred_region
      %103 = dma.done [#allocation3], 16
    $region21: #{tpu_custom_call.1} parent=1 // pred_fallthru
      _
    // Predicated region
    $region22: #{tpu_custom_call.1} parent=1 // pred_check
      _
    $region23: #{tpu_custom_call.1} parent=1 // pred_check_branch
      %105 = sbr.rel (0) target = $region25
    $region24: #{tpu_custom_call.1} parent=1 // pred_region
      %107 = dma.done [#allocation5], 16
    $region25: #{tpu_custom_call.1} parent=1 // pred_fallthru
      _
    %108 = vsyncpa [#allocation3], 1
    %109 = vsyncpa [#allocation5], 1

</llo_original>
